<compile_context>
chip_gen: v5e
topology: v5e:2x2
jax: 0.10.0
libtpu: 0.0.40
codegen_flags: <defaults>
</compile_context>

<pallas_src>
import jax
import jax.numpy as jnp
from jax.experimental import pallas as pl
from jax.experimental.pallas import tpu as pltpu


_VMEM_LIMIT_BYTES = 48 * 1024 * 1024  # > v5e 16 MiB default, < v7x 64 MiB physical


def _round_up(x, m):
    return m * ((x + m - 1) // m)


def choose_tiles(n, tm=256, tk=512):
    """Pick (tm, tk, n_pad): power-of-two x 128 tiles clamped to the problem size."""
    n128 = _round_up(n, 128)
    while tm > 128 and tm > n128:
        tm //= 2
    while tk > 128 and tk > n128:
        tk //= 2
    n_pad = _round_up(n128, max(tm, tk))          # both tiles divide n_pad
    # v7x megacore: keep >= 2 blocks on the parallel (row) axis when possible.
    while tm > 128 and n_pad // tm < 2:
        tm //= 2
    return tm, tk, n_pad


def choose_edge_tile(e, te=512):
    e128 = _round_up(max(e, 1), 128)
    while te > 128 and te > e128:
        te //= 2
    e_pad = _round_up(e128, te)
    return te, e_pad


# ---------------------------------------------------------------------------
# Kernel A: G = relu((A_hat @ X) @ W1 + b1) @ W2        (conv1 + projection)
# ---------------------------------------------------------------------------
def conv1_kernel(a_ref, x_ref, w1_ref, b1_ref, w2_ref, g_ref, acc_ref):
    k = pl.program_id(1)

    @pl.when(k == 0)
    def _():
        acc_ref[...] = jnp.zeros_like(acc_ref)

    # Aggregate first: (A @ X) contracts over nodes with only F0 output columns.
    acc_ref[...] += jnp.dot(a_ref[...], x_ref[...],
                            preferred_element_type=jnp.float32)

    @pl.when(k == pl.num_programs(1) - 1)
    def _():
        ax = acc_ref[...].astype(jnp.bfloat16)                        # (tm, F0)
        h1 = jnp.dot(ax, w1_ref[...], preferred_element_type=jnp.float32)
        h1 = jnp.maximum(h1 + b1_ref[...], 0.0).astype(jnp.bfloat16)  # (tm, hid)
        # NOTE: padded rows carry relu(b1) @ W2 (non-zero iff b1 != 0); they are
        # multiplied by zero columns of A_hat in conv2 and never gathered.
        g_ref[...] = jnp.dot(h1, w2_ref[...],
                             preferred_element_type=jnp.float32
                             ).astype(g_ref.dtype)                    # (tm, out)


# ---------------------------------------------------------------------------
# Kernel B: H2 = A_hat @ G + b2                          (conv2 aggregation)
# ---------------------------------------------------------------------------
def conv2_kernel(a_ref, g_ref, b2_ref, h2_ref, acc_ref):
    k = pl.program_id(1)

    @pl.when(k == 0)
    def _():
        acc_ref[...] = jnp.zeros_like(acc_ref)

    acc_ref[...] += jnp.dot(a_ref[...], g_ref[...],
                            preferred_element_type=jnp.float32)

    @pl.when(k == pl.num_programs(1) - 1)
    def _():
        h2_ref[...] = acc_ref[...] + b2_ref[...]


# ---------------------------------------------------------------------------
# Kernel C: batched edge scores.  Inputs are feature-major (F, TE) blocks
# (features on sublanes, edges on lanes); the sublane reduction lands one score
# per lane -> lane-dense (1, TE) output rows, TE edges per grid step.
# ---------------------------------------------------------------------------
def score_kernel(hi_ref, hj_ref, out_ref):
    out_ref[...] = jnp.sum(hi_ref[...] * hj_ref[...], axis=0, keepdims=True)


# ---------------------------------------------------------------------------
# Wrapper
# ---------------------------------------------------------------------------
def gcn_link_forward(a_pad, x, w1, b1, w2, b2, src_idx, dst_idx, *,
                     tm=256, tk=512, te=512):
    """a_pad: (n_pad, n_pad) bf16 normalized adjacency, pre-padded + cached."""
    n, f0 = x.shape
    hid = w1.shape[1]
    out_dim = w2.shape[1]
    e = src_idx.shape[0]

    tm, tk, n_pad = choose_tiles(n, tm, tk)
    assert a_pad.shape == (n_pad, n_pad), \
        "A_hat must be pre-padded with build_normalized_adjacency(..., n_pad)"

    # X / weights are tiny; cast + pad here.  Biases stay f32.
    x_p = jnp.zeros((n_pad, f0), jnp.bfloat16).at[:n, :].set(x.astype(jnp.bfloat16))
    w1b = w1.astype(jnp.bfloat16)
    w2b = w2.astype(jnp.bfloat16)

    grid = (n_pad // tm, n_pad // tk)
    agg_params = pltpu.CompilerParams(
        dimension_semantics=("parallel", "arbitrary"),
        vmem_limit_bytes=_VMEM_LIMIT_BYTES)

    # ---- conv1 (+ fused relu/bias + H1 @ W2 projection) ---------------------
    g = pl.pallas_call(
        conv1_kernel,
        out_shape=jax.ShapeDtypeStruct((n_pad, out_dim), jnp.bfloat16),
        grid_spec=pltpu.PrefetchScalarGridSpec(
            num_scalar_prefetch=0,
            grid=grid,
            in_specs=[
                # Optionally: pipeline_mode=pl.Buffered(3) if DMA is still exposed.
                pl.BlockSpec((tm, tk), lambda i, k: (i, k)),        # A_hat
                pl.BlockSpec((tk, f0), lambda i, k: (k, 0)),        # X
                pl.BlockSpec((f0, hid), lambda i, k: (0, 0)),       # W1 (resident)
                pl.BlockSpec((1, hid), lambda i, k: (0, 0)),        # b1
                pl.BlockSpec((hid, out_dim), lambda i, k: (0, 0)),  # W2 (resident)
            ],
            out_specs=pl.BlockSpec((tm, out_dim), lambda i, k: (i, 0)),
            scratch_shapes=[pltpu.VMEM((tm, f0), jnp.float32)],
        ),
        compiler_params=agg_params,
    )(a_pad, x_p, w1b, b1, w2b)

    # ---- conv2 aggregation: H2 = A_hat @ G + b2 -----------------------------
    h2 = pl.pallas_call(
        conv2_kernel,
        out_shape=jax.ShapeDtypeStruct((n_pad, out_dim), jnp.float32),
        grid_spec=pltpu.PrefetchScalarGridSpec(
            num_scalar_prefetch=0,
            grid=grid,
            in_specs=[
                pl.BlockSpec((tm, tk), lambda i, k: (i, k)),        # A_hat
                pl.BlockSpec((tk, out_dim), lambda i, k: (k, 0)),   # G
                pl.BlockSpec((1, out_dim), lambda i, k: (0, 0)),    # b2
            ],
            out_specs=pl.BlockSpec((tm, out_dim), lambda i, k: (i, 0)),
            scratch_shapes=[pltpu.VMEM((tm, out_dim), jnp.float32)],
        ),
        compiler_params=agg_params,
    )(a_pad, g, b2)

    # ---- per-edge scoring ----------------------------------------------------
    # The data-dependent row gather (torch.index_select) is done with an XLA
    # gather; the reduction runs as a batched, lane-dense Pallas kernel.
    # TODO(synk): for very large E, move the gather into the kernel with
    # scalar-prefetched indices + a double-buffered make_async_copy row gather.
    te, e_pad = choose_edge_tile(e, te)
    pad_e = e_pad - e
    src_p = jnp.concatenate([src_idx, jnp.zeros((pad_e,), src_idx.dtype)]) \
        if pad_e else src_idx
    dst_p = jnp.concatenate([dst_idx, jnp.zeros((pad_e,), dst_idx.dtype)]) \
        if pad_e else dst_idx

    h2n = h2[:n]                    # (N, 64) f32, drop padded rows
    hi_t = h2n[dst_p].T             # x_i rows, transposed to (64, e_pad)
    hj_t = h2n[src_p].T             # x_j rows, transposed to (64, e_pad)

    scores = pl.pallas_call(
        score_kernel,
        out_shape=jax.ShapeDtypeStruct((e_pad // te, te), jnp.float32),
        grid_spec=pltpu.PrefetchScalarGridSpec(
            num_scalar_prefetch=0,
            grid=(e_pad // te,),
            in_specs=[
                pl.BlockSpec((out_dim, te), lambda b: (0, b)),
                pl.BlockSpec((out_dim, te), lambda b: (0, b)),
            ],
            out_specs=pl.BlockSpec((1, te), lambda b: (b, 0)),
        ),
        compiler_params=pltpu.CompilerParams(
            dimension_semantics=("parallel",)),
    )(hi_t, hj_t)

    return scores.reshape(-1)[:e]


# ---------------------------------------------------------------------------
# Plain-JAX glue: GCN normalization (built pre-padded + bf16, cached outside the
# per-forward path), parameter init, precision-matched reference.
# ---------------------------------------------------------------------------
def build_normalized_adjacency(edge_index, num_nodes, n_pad, dtype=jnp.bfloat16):
    """A_hat[dst, src] = deg^-1/2 * deg^-1/2 with self loops (PyG GCNConv),
    written directly into a zero-padded (n_pad, n_pad) matmul-dtype array."""
    src, dst = edge_index[0], edge_index[1]
    loop = jnp.arange(num_nodes, dtype=edge_index.dtype)
    src = jnp.concatenate([src, loop])
    dst = jnp.concatenate([dst, loop])
    adj = jnp.zeros((n_pad, n_pad), jnp.float32).at[dst, src].add(1.0)
    deg = jnp.sum(adj, axis=1)
    d_inv_sqrt = jnp.where(deg > 0.0, 1.0 / jnp.sqrt(deg), 0.0)
    a_hat = d_inv_sqrt[:, None] * adj * d_inv_sqrt[None, :]
    # TODO(synk): on v7x an fp8 (e4m3) A_hat would halve the dominant HBM stream.
    return a_hat.astype(dtype)


def glorot(key, shape):
    limit = jnp.sqrt(6.0 / (shape[0] + shape[1]))
    return jax.random.uniform(key, shape, jnp.float32, -limit, limit)


def reference_forward(a_pad, x, w1, b1, w2, b2, src, dst):
    """Same math / same precision policy as the kernels (bf16 operands, f32 accum)."""
    n = x.shape[0]
    a = a_pad[:n, :n]                                    # bf16
    ax = jnp.dot(a, x.astype(jnp.bfloat16),
                 preferred_element_type=jnp.float32).astype(jnp.bfloat16)
    h1 = jnp.maximum(
        jnp.dot(ax, w1.astype(jnp.bfloat16),
                preferred_element_type=jnp.float32) + b1, 0.0)
    g = jnp.dot(h1.astype(jnp.bfloat16), w2.astype(jnp.bfloat16),
                preferred_element_type=jnp.float32).astype(jnp.bfloat16)
    h2 = jnp.dot(a, g, preferred_element_type=jnp.float32) + b2
    return jnp.sum(h2[dst] * h2[src], axis=-1)


if __name__ == "__main__":
    key = jax.random.PRNGKey(0)
    k_x, k_tr, k_pos, k_neg, k_w1, k_w2 = jax.random.split(key, 6)

    # Small synthetic "dataset"
    num_nodes = 16
    num_features = 8      # dataset.num_features
    hidden = 128          # conv1 out
    out_dim = 64          # conv2 out
    e_train, e_pos, e_neg = 24, 8, 8

    x = jax.random.normal(k_x, (num_nodes, num_features), jnp.float32)
    train_pos_edge_index = jax.random.randint(k_tr, (2, e_train), 0, num_nodes, jnp.int32)
    pos_edge_index = jax.random.randint(k_pos, (2, e_pos), 0, num_nodes, jnp.int32)
    neg_edge_index = jax.random.randint(k_neg, (2, e_neg), 0, num_nodes, jnp.int32)

    # Parameters (glorot weights, zero bias — GCNConv defaults)
    w1 = glorot(k_w1, (num_features, hidden))
    b1 = jnp.zeros((1, hidden), jnp.float32)
    w2 = glorot(k_w2, (hidden, out_dim))
    b2 = jnp.zeros((1, out_dim), jnp.float32)

    # A_hat built once, pre-padded + bf16 (hoisted out of the forward path).
    _, _, n_pad = choose_tiles(num_nodes)
    a_pad = build_normalized_adjacency(train_pos_edge_index, num_nodes, n_pad)
    a_pad = jax.block_until_ready(a_pad)

    # Forward-pass glue
    total_edge_index = jnp.concatenate([pos_edge_index, neg_edge_index], axis=-1)
    src_idx = total_edge_index[0].astype(jnp.int32)
    dst_idx = total_edge_index[1].astype(jnp.int32)

    # Pallas kernels
    scores = gcn_link_forward(a_pad, x, w1, b1, w2, b2, src_idx, dst_idx)
    scores = jax.block_until_ready(scores)

    # Correctness check against a precision-matched plain-JAX reference
    ref = reference_forward(a_pad, x, w1, b1, w2, b2, src_idx, dst_idx)
    assert scores.shape == (e_pos + e_neg,)
    assert jnp.allclose(scores, ref, rtol=2e-2, atol=2e-2), (scores, ref)

    print("KERNEL_OK")
</pallas_src>

<mosaic_0001>
module attributes {stable_mosaic.version = 11 : i64} {
  func.func @conv1_kernel(%arg0: i32, %arg1: i32, %arg2: memref<128x128xbf16, #tpu.memory_space<vmem>>, %arg3: memref<128x8xbf16, #tpu.memory_space<vmem>>, %arg4: memref<8x128xbf16, #tpu.memory_space<vmem>>, %arg5: memref<1x128xf32, #tpu.memory_space<vmem>>, %arg6: memref<128x64xbf16, #tpu.memory_space<vmem>>, %arg7: memref<128x64xbf16, #tpu.memory_space<vmem>>, %arg8: memref<128x8xf32, #tpu.memory_space<vmem>>) attributes {dimension_semantics = [#tpu.dimension_semantics<parallel>, #tpu.dimension_semantics<arbitrary>], iteration_bounds = array<i64: 1, 1>, scalar_prefetch = 0 : i64, scratch_operands = 1 : i64, tpu.core_type = #tpu.core_type<tc>, window_params = [{transform_indices = @transform_0, window_bounds = array<i64: 128, 128>}, {transform_indices = @transform_1, window_bounds = array<i64: 128, 8>}, {pipeline_mode = #tpu.pipeline_mode<synchronous>, transform_indices = @transform_2, window_bounds = array<i64: 8, 128>}, {pipeline_mode = #tpu.pipeline_mode<synchronous>, transform_indices = @transform_3, window_bounds = array<i64: 1, 128>}, {pipeline_mode = #tpu.pipeline_mode<synchronous>, transform_indices = @transform_4, window_bounds = array<i64: 128, 64>}, {transform_indices = @transform_5, window_bounds = array<i64: 128, 64>}]} {
    %c0_i32 = arith.constant 0 : i32
    %0 = arith.cmpi eq, %arg1, %c0_i32 : i32
    %1 = arith.extui %0 : i1 to i32
    %c0_i32_0 = arith.constant 0 : i32
    %2 = arith.cmpi ne, %1, %c0_i32_0 : i32
    scf.if %2 {
      %cst_10 = arith.constant 0.000000e+00 : f32
      %12 = vector.broadcast %cst_10 : f32 to vector<128x8xf32>
      %c0_11 = arith.constant 0 : index
      %c0_12 = arith.constant 0 : index
      %13 = vector.load %arg8[%c0_11, %c0_12] : memref<128x8xf32, #tpu.memory_space<vmem>>, vector<128x8xf32>
      tpu.vector_store %arg8[%c0_11, %c0_12], %12 {strides = array<i32>} : memref<128x8xf32, #tpu.memory_space<vmem>>, vector<128x8xf32>,
    } else {
    }
    %c0 = arith.constant 0 : index
    %c0_1 = arith.constant 0 : index
    %3 = vector.load %arg8[%c0, %c0_1] : memref<128x8xf32, #tpu.memory_space<vmem>>, vector<128x8xf32>
    %c0_2 = arith.constant 0 : index
    %c0_3 = arith.constant 0 : index
    %4 = vector.load %arg2[%c0_2, %c0_3] : memref<128x128xbf16, #tpu.memory_space<vmem>>, vector<128x128xbf16>
    %c0_4 = arith.constant 0 : index
    %c0_5 = arith.constant 0 : index
    %5 = vector.load %arg3[%c0_4, %c0_5] : memref<128x8xbf16, #tpu.memory_space<vmem>>, vector<128x8xbf16>
    %cst = arith.constant dense<0.000000e+00> : vector<128x8xf32>
    %6 = tpu.matmul %4, %5, %cst {dimension_numbers = #tpu.dot_dimension_numbers<[1], [0], [0], [1], [0, 0, 1, 1], [], []>} : vector<128x128xbf16>, vector<128x8xbf16>, vector<128x8xf32> -> vector<128x8xf32>
    %7 = arith.addf %3, %6 : vector<128x8xf32>
    %c0_6 = arith.constant 0 : index
    %c0_7 = arith.constant 0 : index
    %8 = vector.load %arg8[%c0_6, %c0_7] : memref<128x8xf32, #tpu.memory_space<vmem>>, vector<128x8xf32>
    tpu.vector_store %arg8[%c0_6, %c0_7], %7 {strides = array<i32>} : memref<128x8xf32, #tpu.memory_space<vmem>>, vector<128x8xf32>,
    %c0_i32_8 = arith.constant 0 : i32
    %9 = arith.cmpi eq, %arg1, %c0_i32_8 : i32
    %10 = arith.extui %9 : i1 to i32
    %c0_i32_9 = arith.constant 0 : i32
    %11 = arith.cmpi ne, %10, %c0_i32_9 : i32
    scf.if %11 {
      %c0_10 = arith.constant 0 : index
      %c0_11 = arith.constant 0 : index
      %12 = vector.load %arg8[%c0_10, %c0_11] : memref<128x8xf32, #tpu.memory_space<vmem>>, vector<128x8xf32>
      %13 = arith.truncf %12 : vector<128x8xf32> to vector<128x8xbf16>
      %c0_12 = arith.constant 0 : index
      %c0_13 = arith.constant 0 : index
      %14 = vector.load %arg4[%c0_12, %c0_13] : memref<8x128xbf16, #tpu.memory_space<vmem>>, vector<8x128xbf16>
      %cst_14 = arith.constant dense<0.000000e+00> : vector<128x128xf32>
      %15 = tpu.matmul %13, %14, %cst_14 {dimension_numbers = #tpu.dot_dimension_numbers<[1], [0], [0], [1], [0, 0, 1, 1], [], []>} : vector<128x8xbf16>, vector<8x128xbf16>, vector<128x128xf32> -> vector<128x128xf32>
      %c0_15 = arith.constant 0 : index
      %c0_16 = arith.constant 0 : index
      %16 = vector.load %arg5[%c0_15, %c0_16] : memref<1x128xf32, #tpu.memory_space<vmem>>, vector<1x128xf32>
      %17 = vector.broadcast %16 : vector<1x128xf32> to vector<128x128xf32>
      %18 = arith.addf %15, %17 : vector<128x128xf32>
      %cst_17 = arith.constant 0.000000e+00 : f32
      %19 = vector.broadcast %cst_17 : f32 to vector<128x128xf32>
      %20 = arith.maximumf %18, %19 : vector<128x128xf32>
      %21 = arith.truncf %20 : vector<128x128xf32> to vector<128x128xbf16>
      %c0_18 = arith.constant 0 : index
      %c0_19 = arith.constant 0 : index
      %22 = vector.load %arg6[%c0_18, %c0_19] : memref<128x64xbf16, #tpu.memory_space<vmem>>, vector<128x64xbf16>
      %cst_20 = arith.constant dense<0.000000e+00> : vector<128x64xf32>
      %23 = tpu.matmul %21, %22, %cst_20 {dimension_numbers = #tpu.dot_dimension_numbers<[1], [0], [0], [1], [0, 0, 1, 1], [], []>} : vector<128x128xbf16>, vector<128x64xbf16>, vector<128x64xf32> -> vector<128x64xf32>
      %24 = arith.truncf %23 : vector<128x64xf32> to vector<128x64xbf16>
      %c0_21 = arith.constant 0 : index
      %c0_22 = arith.constant 0 : index
      %25 = vector.load %arg7[%c0_21, %c0_22] : memref<128x64xbf16, #tpu.memory_space<vmem>>, vector<128x64xbf16>
      tpu.vector_store %arg7[%c0_21, %c0_22], %24 {strides = array<i32>} : memref<128x64xbf16, #tpu.memory_space<vmem>>, vector<128x64xbf16>,
    } else {
    }
    return
  }
  func.func @transform_0(%arg0: i32, %arg1: i32) -> (i32, i32) {
    %c0_i32 = arith.constant 0 : i32
    return %arg0, %arg1 : i32, i32
  }
  func.func @transform_1(%arg0: i32, %arg1: i32) -> (i32, i32) {
    %c0_i32 = arith.constant 0 : i32
    %c0_i32_0 = arith.constant 0 : i32
    return %arg1, %c0_i32 : i32, i32
  }
  func.func @transform_2(%arg0: i32, %arg1: i32) -> (i32, i32) {
    %c0_i32 = arith.constant 0 : i32
    %c0_i32_0 = arith.constant 0 : i32
    %c0_i32_1 = arith.constant 0 : i32
    return %c0_i32, %c0_i32_0 : i32, i32
  }
  func.func @transform_3(%arg0: i32, %arg1: i32) -> (i32, i32) {
    %c0_i32 = arith.constant 0 : i32
    %c0_i32_0 = arith.constant 0 : i32
    %c0_i32_1 = arith.constant 0 : i32
    return %c0_i32, %c0_i32_0 : i32, i32
  }
  func.func @transform_4(%arg0: i32, %arg1: i32) -> (i32, i32) {
    %c0_i32 = arith.constant 0 : i32
    %c0_i32_0 = arith.constant 0 : i32
    %c0_i32_1 = arith.constant 0 : i32
    return %c0_i32, %c0_i32_0 : i32, i32
  }
  func.func @transform_5(%arg0: i32, %arg1: i32) -> (i32, i32) {
    %c0_i32 = arith.constant 0 : i32
    %c0_i32_0 = arith.constant 0 : i32
    return %arg0, %c0_i32 : i32, i32
  }
}

</mosaic_0001>

<llo_original>
// kernel: tpu_custom_call.1
$region0: #{tpu_custom_call.1}
  #allocation0 [shape = 'u32[]', space=smem, size = 0x4, offset = 0x4, fixed_abs, tag = 'smem constant byte address 0x4 - core index']
  #allocation1 [shape = 'u32[72,128]{1,0:T(1,128)}', space=vmem, size = 0x9000, scoped, tag = 'internal scratch']
  #allocation2 [shape = 'f32[128,8]{1,0:T(8,128)}', space=vmem, size = 0x10000, scoped, tag = 'scratch operand']
  %s0 = inlined_call_operand.vmem [shape: bf16[128,128], index: 0, kind: input, shape index: {}]
  %s1 = inlined_call_operand.vmem [shape: bf16[128,8], index: 1, kind: input, shape index: {}]
  %s2 = inlined_call_operand.vmem [shape: bf16[8,128], index: 2, kind: input, shape index: {}]
  %s3 = inlined_call_operand.vmem [shape: f32[1,128], index: 3, kind: input, shape index: {}]
  %s4 = inlined_call_operand.vmem [shape: bf16[128,64], index: 4, kind: input, shape index: {}]
  %s5 = inlined_call_operand.vmem [shape: bf16[128,64], index: 5, kind: output, shape index: {}]
  %s6 = sld [smem:[#allocation0]]
  $region38: #{tpu_custom_call.1} parent=0
    _
  %s8 = ssub.s32 1, %s6
  %s9 = scalar_select 0, %s8, %s6
  // Predicated region
  $region2: #{tpu_custom_call.1} parent=0 // pred_check
    _
  $region3: #{tpu_custom_call.1} parent=0 // pred_check_branch
    %11 = sbr.rel (0) target = $region5
  $region4: #{tpu_custom_call.1} parent=0 // pred_region
    _
  $region5: #{tpu_custom_call.1} parent=0 // pred_fallthru
    _
  // Predicated region
  $region6: #{tpu_custom_call.1} parent=0 // pred_check
    _
  $region7: #{tpu_custom_call.1} parent=0 // pred_check_branch
    %13 = sbr.rel (0) target = $region9
  $region8: #{tpu_custom_call.1} parent=0 // pred_region
    _
  $region9: #{tpu_custom_call.1} parent=0 // pred_fallthru
    _
  // Predicated region
  $region10: #{tpu_custom_call.1} parent=0 // pred_check
    _
  $region11: #{tpu_custom_call.1} parent=0 // pred_check_branch
    %15 = sbr.rel (0) target = $region13
  $region12: #{tpu_custom_call.1} parent=0 // pred_region
    _
  $region13: #{tpu_custom_call.1} parent=0 // pred_fallthru
    _
  // Predicated region
  $region14: #{tpu_custom_call.1} parent=0 // pred_check
    _
  $region15: #{tpu_custom_call.1} parent=0 // pred_check_branch
    %17 = sbr.rel (0) target = $region17
  $region16: #{tpu_custom_call.1} parent=0 // pred_region
    _
  $region17: #{tpu_custom_call.1} parent=0 // pred_fallthru
    _
  // Predicated region
  $region18: #{tpu_custom_call.1} parent=0 // pred_check
    _
  $region19: #{tpu_custom_call.1} parent=0 // pred_check_branch
    %19 = sbr.rel (0) target = $region21
  $region20: #{tpu_custom_call.1} parent=0 // pred_region
    _
  $region21: #{tpu_custom_call.1} parent=0 // pred_fallthru
    _
  %p21 = scmp.eq.s32.totalorder 0, 0
  // Predicated region
  $region22: #{tpu_custom_call.1} parent=0 // pred_check
    %p22 = pneg %p21
  $region23: #{tpu_custom_call.1} parent=0 // pred_check_branch
    %24 = sbr.rel (%p22) target = $region25
  $region24: #{tpu_custom_call.1} parent=0 // pred_region
    %vm25 = vcmask 64512
    %26 = vst.msk [vmem:[#allocation2] sm:$0xff] %vm25, 0.0
    %27 = vst.msk [vmem:[#allocation2 + $0x8] sm:$0xff] %vm25, 0.0
    %28 = vst.msk [vmem:[#allocation2 + $0x10] sm:$0xff] %vm25, 0.0
    %29 = vst.msk [vmem:[#allocation2 + $0x18] sm:$0xff] %vm25, 0.0
    %30 = vst.msk [vmem:[#allocation2 + $0x20] sm:$0xff] %vm25, 0.0
    %31 = vst.msk [vmem:[#allocation2 + $0x28] sm:$0xff] %vm25, 0.0
    %32 = vst.msk [vmem:[#allocation2 + $0x30] sm:$0xff] %vm25, 0.0
    %33 = vst.msk [vmem:[#allocation2 + $0x38] sm:$0xff] %vm25, 0.0
    %34 = vst.msk [vmem:[#allocation2 + $0x40] sm:$0xff] %vm25, 0.0
    %35 = vst.msk [vmem:[#allocation2 + $0x48] sm:$0xff] %vm25, 0.0
    %36 = vst.msk [vmem:[#allocation2 + $0x50] sm:$0xff] %vm25, 0.0
    %37 = vst.msk [vmem:[#allocation2 + $0x58] sm:$0xff] %vm25, 0.0
    %38 = vst.msk [vmem:[#allocation2 + $0x60] sm:$0xff] %vm25, 0.0
    %39 = vst.msk [vmem:[#allocation2 + $0x68] sm:$0xff] %vm25, 0.0
    %40 = vst.msk [vmem:[#allocation2 + $0x70] sm:$0xff] %vm25, 0.0
    %41 = vst.msk [vmem:[#allocation2 + $0x78] sm:$0xff] %vm25, 0.0
  $region25: #{tpu_custom_call.1} parent=0 // pred_fallthru
    _
  %v42 = vld [vmem:[#allocation2] sm:$0xff]
  %v43 = vld [vmem:[#allocation2 + $0x8] sm:$0xff]
  %v44 = vld [vmem:[#allocation2 + $0x10] sm:$0xff]
  %v45 = vld [vmem:[#allocation2 + $0x18] sm:$0xff]
  %v46 = vld [vmem:[#allocation2 + $0x20] sm:$0xff]
  %v47 = vld [vmem:[#allocation2 + $0x28] sm:$0xff]
  %v48 = vld [vmem:[#allocation2 + $0x30] sm:$0xff]
  %v49 = vld [vmem:[#allocation2 + $0x38] sm:$0xff]
  %v50 = vld [vmem:[#allocation2 + $0x40] sm:$0xff]
  %v51 = vld [vmem:[#allocation2 + $0x48] sm:$0xff]
  %v52 = vld [vmem:[#allocation2 + $0x50] sm:$0xff]
  %v53 = vld [vmem:[#allocation2 + $0x58] sm:$0xff]
  %v54 = vld [vmem:[#allocation2 + $0x60] sm:$0xff]
  %v55 = vld [vmem:[#allocation2 + $0x68] sm:$0xff]
  %v56 = vld [vmem:[#allocation2 + $0x70] sm:$0xff]
  %v57 = vld [vmem:[#allocation2 + $0x78] sm:$0xff]
  %v58 = vld [vmem:[%s0] sm:$0xf]
  %v59 = vld [vmem:[%s0 + $0x4] sm:$0xf]
  %v60 = vld [vmem:[%s0 + $0x8] sm:$0xf]
  %v61 = vld [vmem:[%s0 + $0xc] sm:$0xf]
  %v62 = vld [vmem:[%s0 + $0x10] sm:$0xf]
  %v63 = vld [vmem:[%s0 + $0x14] sm:$0xf]
  %v64 = vld [vmem:[%s0 + $0x18] sm:$0xf]
  %v65 = vld [vmem:[%s0 + $0x1c] sm:$0xf]
  %v66 = vld [vmem:[%s0 + $0x20] sm:$0xf]
  %v67 = vld [vmem:[%s0 + $0x24] sm:$0xf]
  %v68 = vld [vmem:[%s0 + $0x28] sm:$0xf]
  %v69 = vld [vmem:[%s0 + $0x2c] sm:$0xf]
  %v70 = vld [vmem:[%s0 + $0x30] sm:$0xf]
  %v71 = vld [vmem:[%s0 + $0x34] sm:$0xf]
  %v72 = vld [vmem:[%s0 + $0x38] sm:$0xf]
  %v73 = vld [vmem:[%s0 + $0x3c] sm:$0xf]
  %v74 = vld [vmem:[%s1] sm:$0xf]
  %v75 = vld [vmem:[%s1 + $0x4] sm:$0xf]
  %v76 = vld [vmem:[%s1 + $0x8] sm:$0xf]
  %v77 = vld [vmem:[%s1 + $0xc] sm:$0xf]
  %v78 = vld [vmem:[%s1 + $0x10] sm:$0xf]
  %v79 = vld [vmem:[%s1 + $0x14] sm:$0xf]
  %v80 = vld [vmem:[%s1 + $0x18] sm:$0xf]
  %v81 = vld [vmem:[%s1 + $0x1c] sm:$0xf]
  %v82 = vld [vmem:[%s1 + $0x20] sm:$0xf]
  %v83 = vld [vmem:[%s1 + $0x24] sm:$0xf]
  %v84 = vld [vmem:[%s1 + $0x28] sm:$0xf]
  %v85 = vld [vmem:[%s1 + $0x2c] sm:$0xf]
  %v86 = vld [vmem:[%s1 + $0x30] sm:$0xf]
  %v87 = vld [vmem:[%s1 + $0x34] sm:$0xf]
  %v88 = vld [vmem:[%s1 + $0x38] sm:$0xf]
  %v89 = vld [vmem:[%s1 + $0x3c] sm:$0xf]
  %v106 = vunpack.c.l.b16 %v58
  %v107 = vunpack.c.l.b16 %v59
  %v108 = vunpack.c.l.b16 %v60
  %v109 = vunpack.c.l.b16 %v61
  %v110 = vunpack.c.l.b16 %v62
  %v111 = vunpack.c.l.b16 %v63
  %v112 = vunpack.c.l.b16 %v64
  %v113 = vunpack.c.l.b16 %v65
  %v114 = vunpack.c.l.b16 %v66
  %v115 = vunpack.c.l.b16 %v67
  %v116 = vunpack.c.l.b16 %v68
  %v117 = vunpack.c.l.b16 %v69
  %v118 = vunpack.c.l.b16 %v70
  %v119 = vunpack.c.l.b16 %v71
  %v120 = vunpack.c.l.b16 %v72
  %v121 = vunpack.c.l.b16 %v73
  %v122 = vpack.c.b16 %v107, %v106
  %v123 = vpack.c.b16 %v109, %v108
  %v124 = vpack.c.b16 %v111, %v110
  %v125 = vpack.c.b16 %v113, %v112
  %v126 = vpack.c.b16 %v115, %v114
  %v127 = vpack.c.b16 %v117, %v116
  %v128 = vpack.c.b16 %v119, %v118
  %v129 = vpack.c.b16 %v121, %v120
  %v154 = vunpack.c.l.b16 %v74
  %v155 = vunpack.c.l.b16 %v75
  %v156 = vunpack.c.l.b16 %v76
  %v157 = vunpack.c.l.b16 %v77
  %v158 = vunpack.c.l.b16 %v78
  %v159 = vunpack.c.l.b16 %v79
  %v160 = vunpack.c.l.b16 %v80
  %v161 = vunpack.c.l.b16 %v81
  %v162 = vunpack.c.l.b16 %v82
  %v163 = vunpack.c.l.b16 %v83
  %v164 = vunpack.c.l.b16 %v84
  %v165 = vunpack.c.l.b16 %v85
  %v166 = vunpack.c.l.b16 %v86
  %v167 = vunpack.c.l.b16 %v87
  %v168 = vunpack.c.l.b16 %v88
  %v169 = vunpack.c.l.b16 %v89
  %v170 = vpack.c.b16 %v155, %v154
  %v171 = vpack.c.b16 %v157, %v156
  %v172 = vpack.c.b16 %v159, %v158
  %v173 = vpack.c.b16 %v161, %v160
  %v174 = vpack.c.b16 %v163, %v162
  %v175 = vpack.c.b16 %v165, %v164
  %v176 = vpack.c.b16 %v167, %v166
  %v177 = vpack.c.b16 %v169, %v168
  %186 = vmatpush.bf16.msra.mxu0 %v177
  %187 = vmatpush.bf16.msra.mxu0 %v176
  %188 = vmatpush.bf16.msra.mxu0 %v175
  %189 = vmatpush.bf16.msra.mxu0 %v174
  %190 = vmatpush.bf16.msra.mxu0 %v173
  %191 = vmatpush.bf16.msra.mxu0 %v172
  %192 = vmatpush.bf16.msra.mxu0 %v171
  %193 = vmatpush.bf16.msra.mxu0 %v170
  %194 = vmatmul.bf16.gmra.mxu0 %v122
  %v195 = vpop.f32.mrf.mxu0
  %v196 = vadd.f32 0.0, %v195
  %v197 = vpop.f32.mrf.mxu0
  %v198 = vadd.f32 0.0, %v197
  %199 = vmatmul.bf16.gmra.mxu0 %v123
  %v200 = vpop.f32.mrf.mxu0
  %v201 = vadd.f32 0.0, %v200
  %v202 = vpop.f32.mrf.mxu0
  %v203 = vadd.f32 0.0, %v202
  %204 = vmatmul.bf16.gmra.mxu0 %v124
  %v205 = vpop.f32.mrf.mxu0
  %v206 = vadd.f32 0.0, %v205
  %v207 = vpop.f32.mrf.mxu0
  %v208 = vadd.f32 0.0, %v207
  %209 = vmatmul.bf16.gmra.mxu0 %v125
  %v210 = vpop.f32.mrf.mxu0
  %v211 = vadd.f32 0.0, %v210
  %v212 = vpop.f32.mrf.mxu0
  %v213 = vadd.f32 0.0, %v212
  %214 = vmatmul.bf16.gmra.mxu0 %v126
  %v215 = vpop.f32.mrf.mxu0
  %v216 = vadd.f32 0.0, %v215
  %v217 = vpop.f32.mrf.mxu0
  %v218 = vadd.f32 0.0, %v217
  %219 = vmatmul.bf16.gmra.mxu0 %v127
  %v220 = vpop.f32.mrf.mxu0
  %v221 = vadd.f32 0.0, %v220
  %v222 = vpop.f32.mrf.mxu0
  %v223 = vadd.f32 0.0, %v222
  %224 = vmatmul.bf16.gmra.mxu0 %v128
  %v225 = vpop.f32.mrf.mxu0
  %v226 = vadd.f32 0.0, %v225
  %v227 = vpop.f32.mrf.mxu0
  %v228 = vadd.f32 0.0, %v227
  %229 = vmatmul.bf16.gmra.mxu0 %v129
  %v230 = vpop.f32.mrf.mxu0
  %v231 = vadd.f32 0.0, %v230
  %v232 = vpop.f32.mrf.mxu0
  %v233 = vadd.f32 0.0, %v232
  %234 = vdwg.mxu0
  %v235 = vadd.f32 %v42, %v196
  %v236 = vadd.f32 %v43, %v198
  %v237 = vadd.f32 %v44, %v201
  %v238 = vadd.f32 %v45, %v203
  %v239 = vadd.f32 %v46, %v206
  %v240 = vadd.f32 %v47, %v208
  %v241 = vadd.f32 %v48, %v211
  %v242 = vadd.f32 %v49, %v213
  %v243 = vadd.f32 %v50, %v216
  %v244 = vadd.f32 %v51, %v218
  %v245 = vadd.f32 %v52, %v221
  %v246 = vadd.f32 %v53, %v223
  %v247 = vadd.f32 %v54, %v226
  %v248 = vadd.f32 %v55, %v228
  %v249 = vadd.f32 %v56, %v231
  %v250 = vadd.f32 %v57, %v233
  %vm251 = vcmask 64512
  %252 = vst.msk [vmem:[#allocation2] sm:$0xff] %vm251, %v235
  %253 = vst.msk [vmem:[#allocation2 + $0x8] sm:$0xff] %vm251, %v236
  %254 = vst.msk [vmem:[#allocation2 + $0x10] sm:$0xff] %vm251, %v237
  %255 = vst.msk [vmem:[#allocation2 + $0x18] sm:$0xff] %vm251, %v238
  %256 = vst.msk [vmem:[#allocation2 + $0x20] sm:$0xff] %vm251, %v239
  %257 = vst.msk [vmem:[#allocation2 + $0x28] sm:$0xff] %vm251, %v240
  %258 = vst.msk [vmem:[#allocation2 + $0x30] sm:$0xff] %vm251, %v241
  %259 = vst.msk [vmem:[#allocation2 + $0x38] sm:$0xff] %vm251, %v242
  %260 = vst.msk [vmem:[#allocation2 + $0x40] sm:$0xff] %vm251, %v243
  %261 = vst.msk [vmem:[#allocation2 + $0x48] sm:$0xff] %vm251, %v244
  %262 = vst.msk [vmem:[#allocation2 + $0x50] sm:$0xff] %vm251, %v245
  %263 = vst.msk [vmem:[#allocation2 + $0x58] sm:$0xff] %vm251, %v246
  %264 = vst.msk [vmem:[#allocation2 + $0x60] sm:$0xff] %vm251, %v247
  %265 = vst.msk [vmem:[#allocation2 + $0x68] sm:$0xff] %vm251, %v248
  %266 = vst.msk [vmem:[#allocation2 + $0x70] sm:$0xff] %vm251, %v249
  %267 = vst.msk [vmem:[#allocation2 + $0x78] sm:$0xff] %vm251, %v250
  // Predicated region
  $region26: #{tpu_custom_call.1} parent=0 // pred_check
    %p268 = pneg %p21
  $region27: #{tpu_custom_call.1} parent=0 // pred_check_branch
    %270 = sbr.rel (%p268) target = $region29
  $region28: #{tpu_custom_call.1} parent=0 // pred_region
    %v271 = vld [vmem:[#allocation2] sm:$0xff]
    %v272 = vld [vmem:[#allocation2 + $0x8] sm:$0xff]
    %v273 = vld [vmem:[#allocation2 + $0x10] sm:$0xff]
    %v274 = vld [vmem:[#allocation2 + $0x18] sm:$0xff]
    %v275 = vld [vmem:[#allocation2 + $0x20] sm:$0xff]
    %v276 = vld [vmem:[#allocation2 + $0x28] sm:$0xff]
    %v277 = vld [vmem:[#allocation2 + $0x30] sm:$0xff]
    %v278 = vld [vmem:[#allocation2 + $0x38] sm:$0xff]
    %v279 = vld [vmem:[#allocation2 + $0x40] sm:$0xff]
    %v280 = vld [vmem:[#allocation2 + $0x48] sm:$0xff]
    %v281 = vld [vmem:[#allocation2 + $0x50] sm:$0xff]
    %v282 = vld [vmem:[#allocation2 + $0x58] sm:$0xff]
    %v283 = vld [vmem:[#allocation2 + $0x60] sm:$0xff]
    %v284 = vld [vmem:[#allocation2 + $0x68] sm:$0xff]
    %v285 = vld [vmem:[#allocation2 + $0x70] sm:$0xff]
    %v286 = vld [vmem:[#allocation2 + $0x78] sm:$0xff]
    %v287 = vpack.c.bf16 %v272, %v271
    %v288 = vpack.c.bf16 %v274, %v273
    %v289 = vpack.c.bf16 %v276, %v275
    %v290 = vpack.c.bf16 %v278, %v277
    %v291 = vpack.c.bf16 %v280, %v279
    %v292 = vpack.c.bf16 %v282, %v281
    %v293 = vpack.c.bf16 %v284, %v283
    %v294 = vpack.c.bf16 %v286, %v285
    %v295 = vld [vmem:[%s2] sm:$0xf]
    %v296 = vld [vmem:[%s3] sm:$0x1]
    %v298 = vperm.slane %v296, 0
    %v301 = vsel %vm251, %v287, 0
    %v304 = vsel %vm251, %v288, 0
    %v307 = vsel %vm251, %v289, 0
    %v310 = vsel %vm251, %v290, 0
    %v313 = vsel %vm251, %v291, 0
    %v316 = vsel %vm251, %v292, 0
    %v319 = vsel %vm251, %v293, 0
    %v322 = vsel %vm251, %v294, 0
    %vm324 = vcmask 1043456
    %v326 = vsel %vm324, %v295, 0
    %328 = vmatpush.bf16.msra.mxu0 0
    %329 = vmatpush.bf16.msra.mxu0 0
    %330 = vmatpush.bf16.msra.mxu0 0
    %331 = vmatpush.bf16.msra.mxu0 0
    %332 = vmatpush.bf16.msra.mxu0 0
    %333 = vmatpush.bf16.msra.mxu0 0
    %334 = vmatpush.bf16.msra.mxu0 0
    %335 = vmatpush.bf16.msra.mxu0 %v326
    %336 = vmatmul.bf16.gmra.mxu0 %v301
    %v337 = vpop.f32.mrf.mxu0
    %v338 = vadd.f32 %v298, %v337
    %v339 = vpop.f32.mrf.mxu0
    %v340 = vadd.f32 %v298, %v339
    %341 = vmatmul.bf16.gmra.mxu0 %v304
    %v342 = vpop.f32.mrf.mxu0
    %v343 = vadd.f32 %v298, %v342
    %v344 = vpop.f32.mrf.mxu0
    %v345 = vadd.f32 %v298, %v344
    %346 = vmatmul.bf16.gmra.mxu0 %v307
    %v347 = vpop.f32.mrf.mxu0
    %v348 = vadd.f32 %v298, %v347
    %v349 = vpop.f32.mrf.mxu0
    %v350 = vadd.f32 %v298, %v349
    %351 = vmatmul.bf16.gmra.mxu0 %v310
    %v352 = vpop.f32.mrf.mxu0
    %v353 = vadd.f32 %v298, %v352
    %v354 = vpop.f32.mrf.mxu0
    %v355 = vadd.f32 %v298, %v354
    %356 = vmatmul.bf16.gmra.mxu0 %v313
    %v357 = vpop.f32.mrf.mxu0
    %v358 = vadd.f32 %v298, %v357
    %v359 = vpop.f32.mrf.mxu0
    %v360 = vadd.f32 %v298, %v359
    %361 = vmatmul.bf16.gmra.mxu0 %v316
    %v362 = vpop.f32.mrf.mxu0
    %v363 = vadd.f32 %v298, %v362
    %v364 = vpop.f32.mrf.mxu0
    %v365 = vadd.f32 %v298, %v364
    %366 = vmatmul.bf16.gmra.mxu0 %v319
    %v367 = vpop.f32.mrf.mxu0
    %v368 = vadd.f32 %v298, %v367
    %v369 = vpop.f32.mrf.mxu0
    %v370 = vadd.f32 %v298, %v369
    %371 = vmatmul.bf16.gmra.mxu0 %v322
    %v372 = vpop.f32.mrf.mxu0
    %v373 = vadd.f32 %v298, %v372
    %v374 = vpop.f32.mrf.mxu0
    %v375 = vadd.f32 %v298, %v374
    %376 = vdwg.mxu0
    %v377 = vmax.f32 %v338, 0.0
    %v378 = vmax.f32 %v340, 0.0
    %v379 = vmax.f32 %v343, 0.0
    %v380 = vmax.f32 %v345, 0.0
    %v381 = vmax.f32 %v348, 0.0
    %v382 = vmax.f32 %v350, 0.0
    %v383 = vmax.f32 %v353, 0.0
    %v384 = vmax.f32 %v355, 0.0
    %v385 = vmax.f32 %v358, 0.0
    %v386 = vmax.f32 %v360, 0.0
    %v387 = vmax.f32 %v363, 0.0
    %v388 = vmax.f32 %v365, 0.0
    %v389 = vmax.f32 %v368, 0.0
    %v390 = vmax.f32 %v370, 0.0
    %v391 = vmax.f32 %v373, 0.0
    %v392 = vmax.f32 %v375, 0.0
    %v393 = vpack.c.bf16 %v378, %v377
    %v394 = vpack.c.bf16 %v380, %v379
    %v395 = vpack.c.bf16 %v382, %v381
    %v396 = vpack.c.bf16 %v384, %v383
    %v397 = vpack.c.bf16 %v386, %v385
    %v398 = vpack.c.bf16 %v388, %v387
    %v399 = vpack.c.bf16 %v390, %v389
    %v400 = vpack.c.bf16 %v392, %v391
    %v401 = vld [vmem:[%s4] sm:$0xf]
    %v402 = vld [vmem:[%s4 + $0x4] sm:$0xf]
    %v403 = vld [vmem:[%s4 + $0x8] sm:$0xf]
    %v404 = vld [vmem:[%s4 + $0xc] sm:$0xf]
    %v405 = vld [vmem:[%s4 + $0x10] sm:$0xf]
    %v406 = vld [vmem:[%s4 + $0x14] sm:$0xf]
    %v407 = vld [vmem:[%s4 + $0x18] sm:$0xf]
    %v408 = vld [vmem:[%s4 + $0x1c] sm:$0xf]
    %v409 = vld [vmem:[%s4 + $0x20] sm:$0xf]
    %v410 = vld [vmem:[%s4 + $0x24] sm:$0xf]
    %v411 = vld [vmem:[%s4 + $0x28] sm:$0xf]
    %v412 = vld [vmem:[%s4 + $0x2c] sm:$0xf]
    %v413 = vld [vmem:[%s4 + $0x30] sm:$0xf]
    %v414 = vld [vmem:[%s4 + $0x34] sm:$0xf]
    %v415 = vld [vmem:[%s4 + $0x38] sm:$0xf]
    %v416 = vld [vmem:[%s4 + $0x3c] sm:$0xf]
    %v433 = vunpack.c.l.b16 %v401
    %v434 = vunpack.c.l.b16 %v402
    %v435 = vunpack.c.l.b16 %v403
    %v436 = vunpack.c.l.b16 %v404
    %v437 = vunpack.c.l.b16 %v405
    %v438 = vunpack.c.l.b16 %v406
    %v439 = vunpack.c.l.b16 %v407
    %v440 = vunpack.c.l.b16 %v408
    %v441 = vunpack.c.l.b16 %v409
    %v442 = vunpack.c.l.b16 %v410
    %v443 = vunpack.c.l.b16 %v411
    %v444 = vunpack.c.l.b16 %v412
    %v445 = vunpack.c.l.b16 %v413
    %v446 = vunpack.c.l.b16 %v414
    %v447 = vunpack.c.l.b16 %v415
    %v448 = vunpack.c.l.b16 %v416
    %v449 = vpack.c.b16 %v434, %v433
    %v450 = vpack.c.b16 %v436, %v435
    %v451 = vpack.c.b16 %v438, %v437
    %v452 = vpack.c.b16 %v440, %v439
    %v453 = vpack.c.b16 %v442, %v441
    %v454 = vpack.c.b16 %v444, %v443
    %v455 = vpack.c.b16 %v446, %v445
    %v456 = vpack.c.b16 %v448, %v447
    %465 = vmatpush.bf16.msra.mxu0 %v456
    %466 = vmatpush.bf16.msra.mxu0 %v455
    %467 = vmatpush.bf16.msra.mxu0 %v454
    %468 = vmatpush.bf16.msra.mxu0 %v453
    %469 = vmatpush.bf16.msra.mxu0 %v452
    %470 = vmatpush.bf16.msra.mxu0 %v451
    %471 = vmatpush.bf16.msra.mxu0 %v450
    %472 = vmatpush.bf16.msra.mxu0 %v449
    %473 = vmatmul.bf16.gmra.mxu0 %v393
    %v474 = vpop.f32.mrf.mxu0
    %v475 = vadd.f32 0.0, %v474
    %v476 = vpop.f32.mrf.mxu0
    %v477 = vadd.f32 0.0, %v476
    %478 = vmatmul.bf16.gmra.mxu0 %v394
    %v479 = vpop.f32.mrf.mxu0
    %v480 = vadd.f32 0.0, %v479
    %v481 = vpop.f32.mrf.mxu0
    %v482 = vadd.f32 0.0, %v481
    %483 = vmatmul.bf16.gmra.mxu0 %v395
    %v484 = vpop.f32.mrf.mxu0
    %v485 = vadd.f32 0.0, %v484
    %v486 = vpop.f32.mrf.mxu0
    %v487 = vadd.f32 0.0, %v486
    %488 = vmatmul.bf16.gmra.mxu0 %v396
    %v489 = vpop.f32.mrf.mxu0
    %v490 = vadd.f32 0.0, %v489
    %v491 = vpop.f32.mrf.mxu0
    %v492 = vadd.f32 0.0, %v491
    %493 = vmatmul.bf16.gmra.mxu0 %v397
    %v494 = vpop.f32.mrf.mxu0
    %v495 = vadd.f32 0.0, %v494
    %v496 = vpop.f32.mrf.mxu0
    %v497 = vadd.f32 0.0, %v496
    %498 = vmatmul.bf16.gmra.mxu0 %v398
    %v499 = vpop.f32.mrf.mxu0
    %v500 = vadd.f32 0.0, %v499
    %v501 = vpop.f32.mrf.mxu0
    %v502 = vadd.f32 0.0, %v501
    %503 = vmatmul.bf16.gmra.mxu0 %v399
    %v504 = vpop.f32.mrf.mxu0
    %v505 = vadd.f32 0.0, %v504
    %v506 = vpop.f32.mrf.mxu0
    %v507 = vadd.f32 0.0, %v506
    %508 = vmatmul.bf16.gmra.mxu0 %v400
    %v509 = vpop.f32.mrf.mxu0
    %v510 = vadd.f32 0.0, %v509
    %v511 = vpop.f32.mrf.mxu0
    %v512 = vadd.f32 0.0, %v511
    %513 = vdwg.mxu0
    %v514 = vpack.c.bf16 %v475, %v475
    %v515 = vpack.c.bf16 %v477, %v477
    %v516 = vpack.c.bf16 %v480, %v480
    %v517 = vpack.c.bf16 %v482, %v482
    %v518 = vpack.c.bf16 %v485, %v485
    %v519 = vpack.c.bf16 %v487, %v487
    %v520 = vpack.c.bf16 %v490, %v490
    %v521 = vpack.c.bf16 %v492, %v492
    %v522 = vpack.c.bf16 %v495, %v495
    %v523 = vpack.c.bf16 %v497, %v497
    %v524 = vpack.c.bf16 %v500, %v500
    %v525 = vpack.c.bf16 %v502, %v502
    %v526 = vpack.c.bf16 %v505, %v505
    %v527 = vpack.c.bf16 %v507, %v507
    %v528 = vpack.c.bf16 %v510, %v510
    %v529 = vpack.c.bf16 %v512, %v512
    %vm530 = vcmask 519168
    %531 = vst.msk [vmem:[%s5] sm:$0xf] %vm530, %v514
    %532 = vst.msk [vmem:[%s5 + $0x4] sm:$0xf] %vm530, %v515
    %533 = vst.msk [vmem:[%s5 + $0x8] sm:$0xf] %vm530, %v516
    %534 = vst.msk [vmem:[%s5 + $0xc] sm:$0xf] %vm530, %v517
    %535 = vst.msk [vmem:[%s5 + $0x10] sm:$0xf] %vm530, %v518
    %536 = vst.msk [vmem:[%s5 + $0x14] sm:$0xf] %vm530, %v519
    %537 = vst.msk [vmem:[%s5 + $0x18] sm:$0xf] %vm530, %v520
    %538 = vst.msk [vmem:[%s5 + $0x1c] sm:$0xf] %vm530, %v521
    %539 = vst.msk [vmem:[%s5 + $0x20] sm:$0xf] %vm530, %v522
    %540 = vst.msk [vmem:[%s5 + $0x24] sm:$0xf] %vm530, %v523
    %541 = vst.msk [vmem:[%s5 + $0x28] sm:$0xf] %vm530, %v524
    %542 = vst.msk [vmem:[%s5 + $0x2c] sm:$0xf] %vm530, %v525
    %543 = vst.msk [vmem:[%s5 + $0x30] sm:$0xf] %vm530, %v526
    %544 = vst.msk [vmem:[%s5 + $0x34] sm:$0xf] %vm530, %v527
    %545 = vst.msk [vmem:[%s5 + $0x38] sm:$0xf] %vm530, %v528
    %546 = vst.msk [vmem:[%s5 + $0x3c] sm:$0xf] %vm530, %v529
  $region29: #{tpu_custom_call.1} parent=0 // pred_fallthru
    _
  // Predicated region
  $region30: #{tpu_custom_call.1} parent=0 // pred_check
    _
  $region31: #{tpu_custom_call.1} parent=0 // pred_check_branch
    %548 = sbr.rel (0) target = $region33
  $region32: #{tpu_custom_call.1} parent=0 // pred_region
    _
  $region33: #{tpu_custom_call.1} parent=0 // pred_fallthru
    _
  // Predicated region
  $region34: #{tpu_custom_call.1} parent=0 // pred_check
    _
  $region35: #{tpu_custom_call.1} parent=0 // pred_check_branch
    %550 = sbr.rel (0) target = $region37
  $region36: #{tpu_custom_call.1} parent=0 // pred_region
    _
  $region37: #{tpu_custom_call.1} parent=0 // pred_fallthru
    _

</llo_original>
